<compile_context>
chip_gen: v7x
topology: tpu7x:2x2x1
jax: 0.10.0
libtpu: 0.0.40
codegen_flags: <defaults>
</compile_context>

<pallas_src>
import functools

import jax
import jax.numpy as jnp
from jax.experimental import pallas as pl
from jax.experimental.pallas import tpu as pltpu

HIDDEN = 128

_SINGLE_TC_BATCH_TILE_CAP = 2048   # v5e/v6e: one TC -> amortize per-step grid overhead
_DUAL_TC_BATCH_TILE_CAP = 1024     # v7x: two TCs -> balanced tiles across >= 2 steps
_DUAL_TC_SINGLE_TILE_MAX = 256     # below this a second grid step is not worth it


def _cdiv(a, b):
    return -(-a // b)


def _round_up(x, m):
    return ((x + m - 1) // m) * m


@functools.lru_cache(maxsize=1)
def _is_dual_tensorcore():
    """True on dual-TensorCore chips (v7x); detection failure falls back to single-TC."""
    try:
        kind = jax.devices()[0].device_kind.lower()
    except Exception:
        return False
    return ("v7" in kind) or ("tpu7" in kind) or ("7x" in kind)


def _choose_tiling(batch, max_batch_tile=None):
    """Pick (batch_tile, num_tiles): balanced split, multi-tile rows rounded to 8."""
    dual = _is_dual_tensorcore() and max_batch_tile is None
    cap = max_batch_tile if max_batch_tile is not None else (
        _DUAL_TC_BATCH_TILE_CAP if dual else _SINGLE_TC_BATCH_TILE_CAP)

    if dual and batch > _DUAL_TC_SINGLE_TILE_MAX:
        num_tiles = max(2, _cdiv(batch, cap))
        if num_tiles % 2:
            num_tiles += 1           # even tile count keeps both v7x TCs balanced
    elif batch > cap:
        num_tiles = _cdiv(batch, cap)
    else:
        num_tiles = 1

    if num_tiles == 1:
        tb = batch                    # block == full array dim: always a legal BlockSpec
    else:
        tb = _round_up(_cdiv(batch, num_tiles), 8)
        num_tiles = _cdiv(batch, tb)  # grid just has to cover batch (last block ragged)
    return tb, num_tiles


def _reward_kernel(obs_ref, act_ref, w1_ref, b1_ref, w2_ref, b2_ref, w3_ref,
                   b3_ref, o_ref, xcat_ref):
    """Fused 3-layer MLP forward for one batch tile.

    obs_ref: (TB, obs_dim) f32   act_ref: (TB, act_dim) f32
    w1_ref:  (obs_dim+act_dim, 128) bf16   b1_ref: (1, 128) f32
    w2_ref:  (128, 128) bf16               b2_ref: (1, 128) f32
    w3_ref:  (1, 128) f32                  b3_ref: (1,) f32 in SMEM
    o_ref:   (1, 1, TB) f32  (batch on the lane axis -> lane-dense stores)
    xcat_ref:(TB, obs_dim+act_dim) f32 VMEM scratch
    """
    obs_dim = obs_ref.shape[-1]

    # Pack obs || act into one VMEM tile so layer 1 is a single K=d_in matmul
    # (store/load slots have slack; this removes one of three MXU matmul streams).
    xcat_ref[:, :obs_dim] = obs_ref[...]
    xcat_ref[:, obs_dim:] = act_ref[...]
    x = xcat_ref[...].astype(jnp.bfloat16)          # bf16 MXU operand, f32 accumulate

    h1 = jnp.dot(x, w1_ref[...], preferred_element_type=jnp.float32) + b1_ref[...]
    h1 = jnp.maximum(h1, 0.0)                       # VPU math stays f32 (v5e-friendly)

    h2 = jnp.dot(h1.astype(jnp.bfloat16), w2_ref[...],
                 preferred_element_type=jnp.float32) + b2_ref[...]
    h2 = jnp.maximum(h2, 0.0)

    # Final 128 -> 1 projection: VPU multiply + XLU lane reduction (no N=1 MXU matmul).
    out = jnp.sum(h2 * w3_ref[...], axis=-1) + b3_ref[0]      # (TB,) f32
    o_ref[0, 0, :] = out.astype(o_ref.dtype)


@functools.partial(jax.jit, static_argnames=("max_batch_tile",))
def reward_model_forward(obs_norm, action, params, max_batch_tile=None):
    """Equivalent of RewardModel.forward: returns shape (batch,) float32."""
    w1, b1, w2, b2, w3, b3 = params
    obs = obs_norm.astype(jnp.float32)
    act = action.astype(jnp.float32)
    batch, obs_dim = obs.shape
    act_dim = act.shape[1]
    d_in = obs_dim + act_dim

    # MXU operands in bf16; parameters themselves stay f32 (tiny one-time casts).
    w1_bf16 = w1.astype(jnp.bfloat16)
    w2_bf16 = w2.astype(jnp.bfloat16)

    tb, num_tiles = _choose_tiling(batch, max_batch_tile)

    out = pl.pallas_call(
        _reward_kernel,
        out_shape=jax.ShapeDtypeStruct((num_tiles, 1, tb), jnp.float32),
        grid_spec=pltpu.PrefetchScalarGridSpec(
            num_scalar_prefetch=0,
            grid=(num_tiles,),
            in_specs=[
                pl.BlockSpec((tb, obs_dim), lambda i: (i, 0)),
                pl.BlockSpec((tb, act_dim), lambda i: (i, 0)),
                pl.BlockSpec((d_in, HIDDEN), lambda i: (0, 0)),      # VMEM-resident
                pl.BlockSpec((1, HIDDEN), lambda i: (0, 0)),
                pl.BlockSpec((HIDDEN, HIDDEN), lambda i: (0, 0)),
                pl.BlockSpec((1, HIDDEN), lambda i: (0, 0)),
                pl.BlockSpec((1, HIDDEN), lambda i: (0, 0)),         # w3 projection row
                pl.BlockSpec(memory_space=pltpu.MemorySpace.SMEM),   # b3 scalar
            ],
            out_specs=pl.BlockSpec((1, 1, tb), lambda i: (i, 0, 0)),
            scratch_shapes=[pltpu.VMEM((tb, d_in), jnp.float32)],
        ),
        compiler_params=pltpu.CompilerParams(
            dimension_semantics=("parallel",),
        ),
    )(obs, act, w1_bf16, b1, w2_bf16, b2, w3, b3)

    # (num_tiles, 1, tb) -> (batch,): squeeze(-1) of the PyTorch module + drop tail rows.
    return out.reshape(-1)[:batch]


def init_params(key, obs_dim, action_dim):
    """Orthogonal init (std=sqrt(2)) of weights, zero biases, mirroring layer_init().

    Weights are stored as (in, out), i.e. the transpose of nn.Linear.weight, all f32.
    """
    d_in = obs_dim + action_dim
    k1, k2, k3 = jax.random.split(key, 3)
    ortho = jax.nn.initializers.orthogonal(scale=jnp.sqrt(2.0))
    w1 = ortho(k1, (d_in, HIDDEN), jnp.float32)
    b1 = jnp.zeros((1, HIDDEN), jnp.float32)
    w2 = ortho(k2, (HIDDEN, HIDDEN), jnp.float32)
    b2 = jnp.zeros((1, HIDDEN), jnp.float32)
    w3 = ortho(k3, (1, HIDDEN), jnp.float32)       # stored as the (1, 128) projection row
    b3 = jnp.zeros((1,), jnp.float32)
    return (w1, b1, w2, b2, w3, b3)


def _reference_forward(obs_norm, action, params):
    """Pure-JAX f32 reference for the correctness check."""
    w1, b1, w2, b2, w3, b3 = params
    x = jnp.concatenate([obs_norm.astype(jnp.float32), action.astype(jnp.float32)], axis=1)
    h1 = jnp.maximum(x @ w1 + b1, 0.0)
    h2 = jnp.maximum(h1 @ w2 + b2, 0.0)
    return h2 @ w3[0] + b3[0]


if __name__ == "__main__":
    obs_dim, action_dim = 8, 4
    key = jax.random.PRNGKey(0)
    k_params, k_bias, k_data = jax.random.split(key, 3)

    w1, _, w2, _, w3, _ = init_params(k_params, obs_dim, action_dim)
    # Non-zero biases so the bias path is actually exercised.
    kb1, kb2, kb3 = jax.random.split(k_bias, 3)
    params = (
        w1,
        jax.random.normal(kb1, (1, HIDDEN), jnp.float32),
        w2,
        jax.random.normal(kb2, (1, HIDDEN), jnp.float32),
        w3,
        jax.random.normal(kb3, (1,), jnp.float32),
    )

    cases = [
        (2, None),     # tiny single-tile
        (20, None),    # ragged single-tile (batch not a multiple of 8)
        (200, 64),     # forced multi-tile grid with a ragged final input block
        (1030, None),  # ~1k batch on the default tiling path (multi-tile on v7x)
    ]
    ok = True
    for batch, cap in cases:
        ko, ka = jax.random.split(jax.random.fold_in(k_data, batch))
        obs_norm = jax.random.normal(ko, (batch, obs_dim), jnp.float32)
        action = jax.random.normal(ka, (batch, action_dim), jnp.float32)

        out = reward_model_forward(obs_norm, action, params, max_batch_tile=cap)
        out = jax.block_until_ready(out)
        ref = _reference_forward(obs_norm, action, params)

        assert out.shape == (batch,), out.shape
        # bf16 MXU operands (f32 accumulation) vs the pure-f32 reference -> ~1e-2 error.
        ok = ok and bool(jnp.allclose(out, ref, atol=5e-2, rtol=5e-2))

    assert ok
    print("KERNEL_OK")
</pallas_src>

<mosaic_0001>
module attributes {stable_mosaic.version = 11 : i64} {
  func.func @_reward_kernel(%arg0: i32, %arg1: memref<2x8xf32, #tpu.memory_space<vmem>>, %arg2: memref<2x4xf32, #tpu.memory_space<vmem>>, %arg3: memref<12x128xbf16, #tpu.memory_space<vmem>>, %arg4: memref<1x128xf32, #tpu.memory_space<vmem>>, %arg5: memref<128x128xbf16, #tpu.memory_space<vmem>>, %arg6: memref<1x128xf32, #tpu.memory_space<vmem>>, %arg7: memref<1x128xf32, #tpu.memory_space<vmem>>, %arg8: memref<1xf32, #tpu.memory_space<smem>>, %arg9: memref<1x1x2xf32, #tpu.memory_space<vmem>>, %arg10: memref<2x12xf32, #tpu.memory_space<vmem>>) attributes {dimension_semantics = [#tpu.dimension_semantics<parallel>], iteration_bounds = array<i64: 1>, scalar_prefetch = 0 : i64, scratch_operands = 1 : i64, tpu.core_type = #tpu.core_type<tc>, window_params = [{transform_indices = @transform_0, window_bounds = array<i64: 2, 8>}, {transform_indices = @transform_1, window_bounds = array<i64: 2, 4>}, {pipeline_mode = #tpu.pipeline_mode<synchronous>, transform_indices = @transform_2, window_bounds = array<i64: 12, 128>}, {pipeline_mode = #tpu.pipeline_mode<synchronous>, transform_indices = @transform_3, window_bounds = array<i64: 1, 128>}, {pipeline_mode = #tpu.pipeline_mode<synchronous>, transform_indices = @transform_4, window_bounds = array<i64: 128, 128>}, {pipeline_mode = #tpu.pipeline_mode<synchronous>, transform_indices = @transform_5, window_bounds = array<i64: 1, 128>}, {pipeline_mode = #tpu.pipeline_mode<synchronous>, transform_indices = @transform_6, window_bounds = array<i64: 1, 128>}, {transform_indices = @transform_7, window_bounds = array<i64: 1>}, {transform_indices = @transform_8, window_bounds = array<i64: 1, 1, 2>}]} {
    %c0 = arith.constant 0 : index
    %c0_0 = arith.constant 0 : index
    %0 = vector.load %arg1[%c0, %c0_0] : memref<2x8xf32, #tpu.memory_space<vmem>>, vector<2x8xf32>
    %c0_1 = arith.constant 0 : index
    %c0_2 = arith.constant 0 : index
    %1 = vector.load %arg10[%c0_1, %c0_2] : memref<2x12xf32, #tpu.memory_space<vmem>>, vector<2x8xf32>
    tpu.vector_store %arg10[%c0_1, %c0_2], %0 {strides = array<i32>} : memref<2x12xf32, #tpu.memory_space<vmem>>, vector<2x8xf32>,
    %c0_3 = arith.constant 0 : index
    %c0_4 = arith.constant 0 : index
    %2 = vector.load %arg2[%c0_3, %c0_4] : memref<2x4xf32, #tpu.memory_space<vmem>>, vector<2x4xf32>
    %c0_5 = arith.constant 0 : index
    %c8 = arith.constant 8 : index
    %3 = vector.load %arg10[%c0_5, %c8] : memref<2x12xf32, #tpu.memory_space<vmem>>, vector<2x4xf32>
    tpu.vector_store %arg10[%c0_5, %c8], %2 {strides = array<i32>} : memref<2x12xf32, #tpu.memory_space<vmem>>, vector<2x4xf32>,
    %c0_6 = arith.constant 0 : index
    %c0_7 = arith.constant 0 : index
    %4 = vector.load %arg10[%c0_6, %c0_7] : memref<2x12xf32, #tpu.memory_space<vmem>>, vector<2x12xf32>
    %5 = arith.truncf %4 : vector<2x12xf32> to vector<2x12xbf16>
    %c0_8 = arith.constant 0 : index
    %c0_9 = arith.constant 0 : index
    %6 = vector.load %arg3[%c0_8, %c0_9] : memref<12x128xbf16, #tpu.memory_space<vmem>>, vector<12x128xbf16>
    %cst = arith.constant dense<0.000000e+00> : vector<2x128xf32>
    %7 = tpu.matmul %5, %6, %cst {dimension_numbers = #tpu.dot_dimension_numbers<[1], [0], [0], [1], [0, 0, 1, 1], [], []>} : vector<2x12xbf16>, vector<12x128xbf16>, vector<2x128xf32> -> vector<2x128xf32>
    %c0_10 = arith.constant 0 : index
    %c0_11 = arith.constant 0 : index
    %8 = vector.load %arg4[%c0_10, %c0_11] : memref<1x128xf32, #tpu.memory_space<vmem>>, vector<1x128xf32>
    %9 = vector.broadcast %8 : vector<1x128xf32> to vector<2x128xf32>
    %10 = arith.addf %7, %9 : vector<2x128xf32>
    %cst_12 = arith.constant 0.000000e+00 : f32
    %11 = vector.broadcast %cst_12 : f32 to vector<2x128xf32>
    %12 = arith.maximumf %10, %11 : vector<2x128xf32>
    %13 = arith.truncf %12 : vector<2x128xf32> to vector<2x128xbf16>
    %c0_13 = arith.constant 0 : index
    %c0_14 = arith.constant 0 : index
    %14 = vector.load %arg5[%c0_13, %c0_14] : memref<128x128xbf16, #tpu.memory_space<vmem>>, vector<128x128xbf16>
    %cst_15 = arith.constant dense<0.000000e+00> : vector<2x128xf32>
    %15 = tpu.matmul %13, %14, %cst_15 {dimension_numbers = #tpu.dot_dimension_numbers<[1], [0], [0], [1], [0, 0, 1, 1], [], []>} : vector<2x128xbf16>, vector<128x128xbf16>, vector<2x128xf32> -> vector<2x128xf32>
    %c0_16 = arith.constant 0 : index
    %c0_17 = arith.constant 0 : index
    %16 = vector.load %arg6[%c0_16, %c0_17] : memref<1x128xf32, #tpu.memory_space<vmem>>, vector<1x128xf32>
    %17 = vector.broadcast %16 : vector<1x128xf32> to vector<2x128xf32>
    %18 = arith.addf %15, %17 : vector<2x128xf32>
    %cst_18 = arith.constant 0.000000e+00 : f32
    %19 = vector.broadcast %cst_18 : f32 to vector<2x128xf32>
    %20 = arith.maximumf %18, %19 : vector<2x128xf32>
    %c0_19 = arith.constant 0 : index
    %c0_20 = arith.constant 0 : index
    %21 = vector.load %arg7[%c0_19, %c0_20] : memref<1x128xf32, #tpu.memory_space<vmem>>, vector<1x128xf32>
    %22 = vector.broadcast %21 : vector<1x128xf32> to vector<2x128xf32>
    %23 = arith.mulf %20, %22 : vector<2x128xf32>
    %cst_21 = arith.constant dense<0.000000e+00> : vector<2xf32>
    %24 = vector.multi_reduction <add>, %23, %cst_21 [1] : vector<2x128xf32> to vector<2xf32>
    %c0_22 = arith.constant 0 : index
    %25 = memref.load %arg8[%c0_22] : memref<1xf32, #tpu.memory_space<smem>>
    %26 = vector.broadcast %25 : f32 to vector<2xf32>
    %27 = arith.addf %24, %26 : vector<2xf32>
    %c0_23 = arith.constant 0 : index
    %c0_24 = arith.constant 0 : index
    %c0_25 = arith.constant 0 : index
    %28 = vector.load %arg9[%c0_23, %c0_24, %c0_25] : memref<1x1x2xf32, #tpu.memory_space<vmem>>, vector<1x1x2xf32>
    %29 = vector.shape_cast %28 : vector<1x1x2xf32> to vector<2xf32>
    %30 = vector.shape_cast %27 : vector<2xf32> to vector<1x1x2xf32>
    tpu.vector_store %arg9[%c0_23, %c0_24, %c0_25], %30 {strides = array<i32>} : memref<1x1x2xf32, #tpu.memory_space<vmem>>, vector<1x1x2xf32>,
    return
  }
  func.func @transform_0(%arg0: i32) -> (i32, i32) {
    %c0_i32 = arith.constant 0 : i32
    %c0_i32_0 = arith.constant 0 : i32
    return %arg0, %c0_i32 : i32, i32
  }
  func.func @transform_1(%arg0: i32) -> (i32, i32) {
    %c0_i32 = arith.constant 0 : i32
    %c0_i32_0 = arith.constant 0 : i32
    return %arg0, %c0_i32 : i32, i32
  }
  func.func @transform_2(%arg0: i32) -> (i32, i32) {
    %c0_i32 = arith.constant 0 : i32
    %c0_i32_0 = arith.constant 0 : i32
    %c0_i32_1 = arith.constant 0 : i32
    return %c0_i32, %c0_i32_0 : i32, i32
  }
  func.func @transform_3(%arg0: i32) -> (i32, i32) {
    %c0_i32 = arith.constant 0 : i32
    %c0_i32_0 = arith.constant 0 : i32
    %c0_i32_1 = arith.constant 0 : i32
    return %c0_i32, %c0_i32_0 : i32, i32
  }
  func.func @transform_4(%arg0: i32) -> (i32, i32) {
    %c0_i32 = arith.constant 0 : i32
    %c0_i32_0 = arith.constant 0 : i32
    %c0_i32_1 = arith.constant 0 : i32
    return %c0_i32, %c0_i32_0 : i32, i32
  }
  func.func @transform_5(%arg0: i32) -> (i32, i32) {
    %c0_i32 = arith.constant 0 : i32
    %c0_i32_0 = arith.constant 0 : i32
    %c0_i32_1 = arith.constant 0 : i32
    return %c0_i32, %c0_i32_0 : i32, i32
  }
  func.func @transform_6(%arg0: i32) -> (i32, i32) {
    %c0_i32 = arith.constant 0 : i32
    %c0_i32_0 = arith.constant 0 : i32
    %c0_i32_1 = arith.constant 0 : i32
    return %c0_i32, %c0_i32_0 : i32, i32
  }
  func.func @transform_7(%arg0: i32) -> i32 {
    %c0_i32 = arith.constant 0 : i32
    %c0_i32_0 = arith.constant 0 : i32
    return %c0_i32 : i32
  }
  func.func @transform_8(%arg0: i32) -> (i32, i32, i32) {
    %c0_i32 = arith.constant 0 : i32
    %c0_i32_0 = arith.constant 0 : i32
    %c0_i32_1 = arith.constant 0 : i32
    return %arg0, %c0_i32, %c0_i32_0 : i32, i32, i32
  }
}

</mosaic_0001>

<llo_original>
// kernel: reward_model_forward.1
$region0: #{reward_model_forward.1}
  #allocation0 [shape = 'u32[]', space=smem, size = 0x4, offset = 0x4, fixed_abs, tag = 'smem constant byte address 0x4 - core index']
  #allocation1 [shape = 'u32[144,128]{1,0:T(1,128)}', space=vmem, size = 0x12000, scoped, tag = 'internal scratch']
  #allocation2 [shape = 'f32[2,12]{1,0:T(2,128)}', space=vmem, size = 0x400, scoped, tag = 'scratch operand']
  #allocation3 [shape = 'f32[1]{0:T(128)S(6)}', space=smem, size = 0x200, scoped, tag = 'scoped memory for reward_model_forward.1']
  %s0 = inlined_call_operand.vmem [shape: f32[2,8], index: 0, kind: input, shape index: {}]
  %s1 = inlined_call_operand.vmem [shape: f32[2,4], index: 1, kind: input, shape index: {}]
  %s2 = inlined_call_operand.vmem [shape: bf16[12,128], index: 2, kind: input, shape index: {}]
  %s3 = inlined_call_operand.vmem [shape: f32[1,128], index: 3, kind: input, shape index: {}]
  %s4 = inlined_call_operand.vmem [shape: bf16[128,128], index: 4, kind: input, shape index: {}]
  %s5 = inlined_call_operand.vmem [shape: f32[1,128], index: 5, kind: input, shape index: {}]
  %s6 = inlined_call_operand.vmem [shape: f32[1,128], index: 6, kind: input, shape index: {}]
  %s7 = inlined_call_operand.<no memory space> [shape: f32[1], index: 7, kind: input, shape index: {}]
  %s8 = inlined_call_operand.hbm [shape: f32[1,1,2], index: 8, kind: output, shape index: {}]
  %s9 = sld [smem:[#allocation0]]
  $region42: #{reward_model_forward.1} parent=0
    _
  %s11 = ssub.s32 1, %s9
  %s12 = scalar_select 0, %s11, %s9
  %13 = sst [smem:[#allocation3]] %s7
  $region1: #{reward_model_forward.1} parent=0
    #allocation4 [shape = 'u8[512]{0}', space=vmem, size = 0x400, scoped, tag = 'output window, operand 0, single buffered']
    #allocation5 [shape = 's32[1]{0}', space=sflag, size = 0x4, scoped, tag = 'scoped memory for reward_model_forward.1']
    %14 = vsyncpa [#allocation5], 0
    // Predicated region
    $region2: #{reward_model_forward.1} parent=1 // pred_check
      _
    $region3: #{reward_model_forward.1} parent=1 // pred_check_branch
      %16 = sbr.rel (0) target = $region5
    $region4: #{reward_model_forward.1} parent=1 // pred_region
      _
    $region5: #{reward_model_forward.1} parent=1 // pred_fallthru
      _
    // Predicated region
    $region6: #{reward_model_forward.1} parent=1 // pred_check
      _
    $region7: #{reward_model_forward.1} parent=1 // pred_check_branch
      %18 = sbr.rel (0) target = $region9
    $region8: #{reward_model_forward.1} parent=1 // pred_region
      _
    $region9: #{reward_model_forward.1} parent=1 // pred_fallthru
      _
    // Predicated region
    $region10: #{reward_model_forward.1} parent=1 // pred_check
      _
    $region11: #{reward_model_forward.1} parent=1 // pred_check_branch
      %20 = sbr.rel (0) target = $region13
    $region12: #{reward_model_forward.1} parent=1 // pred_region
      _
    $region13: #{reward_model_forward.1} parent=1 // pred_fallthru
      _
    // Predicated region
    $region14: #{reward_model_forward.1} parent=1 // pred_check
      _
    $region15: #{reward_model_forward.1} parent=1 // pred_check_branch
      %22 = sbr.rel (0) target = $region17
    $region16: #{reward_model_forward.1} parent=1 // pred_region
      _
    $region17: #{reward_model_forward.1} parent=1 // pred_fallthru
      _
    // Predicated region
    $region18: #{reward_model_forward.1} parent=1 // pred_check
      _
    $region19: #{reward_model_forward.1} parent=1 // pred_check_branch
      %24 = sbr.rel (0) target = $region21
    $region20: #{reward_model_forward.1} parent=1 // pred_region
      _
    $region21: #{reward_model_forward.1} parent=1 // pred_fallthru
      _
    // Predicated region
    $region22: #{reward_model_forward.1} parent=1 // pred_check
      _
    $region23: #{reward_model_forward.1} parent=1 // pred_check_branch
      %26 = sbr.rel (0) target = $region25
    $region24: #{reward_model_forward.1} parent=1 // pred_region
      _
    $region25: #{reward_model_forward.1} parent=1 // pred_fallthru
      _
    // Predicated region
    $region26: #{reward_model_forward.1} parent=1 // pred_check
      _
    $region27: #{reward_model_forward.1} parent=1 // pred_check_branch
      %28 = sbr.rel (0) target = $region29
    $region28: #{reward_model_forward.1} parent=1 // pred_region
      _
    $region29: #{reward_model_forward.1} parent=1 // pred_fallthru
      _
    // Predicated region
    $region30: #{reward_model_forward.1} parent=1 // pred_check
      _
    $region31: #{reward_model_forward.1} parent=1 // pred_check_branch
      %30 = sbr.rel (0) target = $region33
    $region32: #{reward_model_forward.1} parent=1 // pred_region
      _
    $region33: #{reward_model_forward.1} parent=1 // pred_fallthru
      _
    %v32 = vld [vmem:[%s0] sm:$0x3]
    %vm33 = vcmask 58368
    %34 = vst.msk [vmem:[#allocation2] sm:$0x3] %vm33, %v32
    %v35 = vld [vmem:[%s1] sm:$0x3]
    %37 = vrot.lane.b32.xlu0 %v35, 8
    %v38 = vpop.permute.xlu0 %37
    %vm40 = vcmask 91200
    %41 = vst.msk [vmem:[#allocation2] sm:$0x3] %vm40, %v38
    %v42 = vld [vmem:[#allocation2] sm:$0x3]
    %v43 = vpack.c.bf16 %v42, %v42
    %v44 = vld [vmem:[%s2] sm:$0xf]
    %v45 = vld [vmem:[%s2 + $0x4] sm:$0x3]
    %v46 = vld [vmem:[%s3] sm:$0x1]
    %v48 = vlaneseq
    %v49 = vshrl.u32 %v48, 7
    %v50 = vsub.s32 0, %v49
    %v51 = vrot.slane %v46, %v50
    %v55 = vunpack.c.l.b16 %v44
    %v56 = vunpack.c.l.b16 %v45
    %v57 = vpack.c.b16 %v56, %v55
    %vm58 = vcmask 97280
    %v60 = vsel %vm58, %v43, 0
    %vm62 = vcmask 1045504
    %v64 = vsel %vm62, %v57, 0
    %66 = vmatprep.subr.bf16.mxu0 0
    %67 = vmatpush1.bf16.msra.mxu0 %v64
    %68 = vmatprep.subr.bf16.mxu0 0
    %69 = vmatpush1.bf16.msra.mxu0 0
    %70 = vmatprep.subr.bf16.mxu0 0
    %71 = vmatpush1.bf16.msra.mxu0 0
    %72 = vmatprep.subr.bf16.mxu0 0
    %73 = vmatpush1.bf16.msra.mxu0 0
    %74 = vmatprep.subr.bf16.mxu0 0
    %75 = vmatpush1.bf16.msra.mxu0 0
    %76 = vmatprep.subr.bf16.mxu0 0
    %77 = vmatpush1.bf16.msra.mxu0 0
    %78 = vmatprep.subr.bf16.mxu0 0
    %79 = vmatpush1.bf16.msra.mxu0 0
    %80 = vmatprep.subr.bf16.mxu0 0
    %81 = vmatpush1.bf16.msra.mxu0 0
    %82 = vmatprep.subr.bf16.mxu0 0
    %83 = vmatpush1.bf16.msra.mxu0 0
    %84 = vmatprep.subr.bf16.mxu0 0
    %85 = vmatpush1.bf16.msra.mxu0 0
    %86 = vmatprep.subr.bf16.mxu0 0
    %87 = vmatpush1.bf16.msra.mxu0 0
    %88 = vmatprep.subr.bf16.mxu0 0
    %89 = vmatpush1.bf16.msra.mxu0 0
    %90 = vmatprep.subr.bf16.mxu0 0
    %91 = vmatpush1.bf16.msra.mxu0 0
    %92 = vmatprep.subr.bf16.mxu0 0
    %93 = vmatpush1.bf16.msra.mxu0 0
    %94 = vmatprep.subr.bf16.mxu0 0
    %95 = vmatpush1.bf16.msra.mxu0 0
    %96 = vmatprep.subr.bf16.mxu0 0
    %97 = vmatpush1.bf16.msra.mxu0 0
    %98 = vmatprep.mubr.bf16.mxu0 0
    %99 = vmatmul.mubr.bf16.gmra.mrb[0].mxu0 %v60
    %v100 = vpop.f32.mrb[0].mxu0
    %v101 = vadd.f32 %v51, %v100
    %v102 = vpop.f32.mrb[0].mxu0
    %v103 = vpop.f32.mrb[0].mxu0
    %v104 = vpop.f32.mrb[0].mxu0
    %105 = vdwg.mxu0
    %v106 = vmax.f32 %v101, 0.0
    %v107 = vpack.c.bf16 %v106, %v106
    %v108 = vld [vmem:[%s4] sm:$0xf]
    %v109 = vld [vmem:[%s4 + $0x4] sm:$0xf]
    %v110 = vld [vmem:[%s4 + $0x8] sm:$0xf]
    %v111 = vld [vmem:[%s4 + $0xc] sm:$0xf]
    %v112 = vld [vmem:[%s4 + $0x10] sm:$0xf]
    %v113 = vld [vmem:[%s4 + $0x14] sm:$0xf]
    %v114 = vld [vmem:[%s4 + $0x18] sm:$0xf]
    %v115 = vld [vmem:[%s4 + $0x1c] sm:$0xf]
    %v116 = vld [vmem:[%s4 + $0x20] sm:$0xf]
    %v117 = vld [vmem:[%s4 + $0x24] sm:$0xf]
    %v118 = vld [vmem:[%s4 + $0x28] sm:$0xf]
    %v119 = vld [vmem:[%s4 + $0x2c] sm:$0xf]
    %v120 = vld [vmem:[%s4 + $0x30] sm:$0xf]
    %v121 = vld [vmem:[%s4 + $0x34] sm:$0xf]
    %v122 = vld [vmem:[%s4 + $0x38] sm:$0xf]
    %v123 = vld [vmem:[%s4 + $0x3c] sm:$0xf]
    %v124 = vld [vmem:[%s5] sm:$0x1]
    %v126 = vlaneseq
    %v127 = vshrl.u32 %v126, 7
    %v128 = vsub.s32 0, %v127
    %v129 = vrot.slane %v124, %v128
    %v147 = vunpack.c.l.b16 %v108
    %v148 = vunpack.c.l.b16 %v109
    %v149 = vunpack.c.l.b16 %v110
    %v150 = vunpack.c.l.b16 %v111
    %v151 = vunpack.c.l.b16 %v112
    %v152 = vunpack.c.l.b16 %v113
    %v153 = vunpack.c.l.b16 %v114
    %v154 = vunpack.c.l.b16 %v115
    %v155 = vunpack.c.l.b16 %v116
    %v156 = vunpack.c.l.b16 %v117
    %v157 = vunpack.c.l.b16 %v118
    %v158 = vunpack.c.l.b16 %v119
    %v159 = vunpack.c.l.b16 %v120
    %v160 = vunpack.c.l.b16 %v121
    %v161 = vunpack.c.l.b16 %v122
    %v162 = vunpack.c.l.b16 %v123
    %v163 = vpack.c.b16 %v148, %v147
    %v164 = vpack.c.b16 %v150, %v149
    %v165 = vpack.c.b16 %v152, %v151
    %v166 = vpack.c.b16 %v154, %v153
    %v167 = vpack.c.b16 %v156, %v155
    %v168 = vpack.c.b16 %v158, %v157
    %v169 = vpack.c.b16 %v160, %v159
    %v170 = vpack.c.b16 %v162, %v161
    %179 = vmatprep.subr.bf16.mxu0 0
    %180 = vmatpush1.bf16.msra.mxu0 %v163
    %181 = vmatprep.subr.bf16.mxu0 0
    %182 = vmatpush1.bf16.msra.mxu0 %v164
    %183 = vmatprep.subr.bf16.mxu0 0
    %184 = vmatpush1.bf16.msra.mxu0 %v165
    %185 = vmatprep.subr.bf16.mxu0 0
    %186 = vmatpush1.bf16.msra.mxu0 %v166
    %187 = vmatprep.subr.bf16.mxu0 0
    %188 = vmatpush1.bf16.msra.mxu0 %v167
    %189 = vmatprep.subr.bf16.mxu0 0
    %190 = vmatpush1.bf16.msra.mxu0 %v168
    %191 = vmatprep.subr.bf16.mxu0 0
    %192 = vmatpush1.bf16.msra.mxu0 %v169
    %193 = vmatprep.subr.bf16.mxu0 0
    %194 = vmatpush1.bf16.msra.mxu0 %v170
    %195 = vmatprep.subr.bf16.mxu0 0
    %196 = vmatpush1.bf16.msra.mxu0 0
    %197 = vmatprep.subr.bf16.mxu0 0
    %198 = vmatpush1.bf16.msra.mxu0 0
    %199 = vmatprep.subr.bf16.mxu0 0
    %200 = vmatpush1.bf16.msra.mxu0 0
    %201 = vmatprep.subr.bf16.mxu0 0
    %202 = vmatpush1.bf16.msra.mxu0 0
    %203 = vmatprep.subr.bf16.mxu0 0
    %204 = vmatpush1.bf16.msra.mxu0 0
    %205 = vmatprep.subr.bf16.mxu0 0
    %206 = vmatpush1.bf16.msra.mxu0 0
    %207 = vmatprep.subr.bf16.mxu0 0
    %208 = vmatpush1.bf16.msra.mxu0 0
    %209 = vmatprep.subr.bf16.mxu0 0
    %210 = vmatpush1.bf16.msra.mxu0 0
    %211 = vmatprep.mubr.bf16.mxu0 0
    %212 = vmatmul.mubr.bf16.gmra.mrb[0].mxu0 %v107
    %v213 = vpop.f32.mrb[0].mxu0
    %v214 = vadd.f32 %v129, %v213
    %v215 = vpop.f32.mrb[0].mxu0
    %v216 = vpop.f32.mrb[0].mxu0
    %v217 = vpop.f32.mrb[0].mxu0
    %218 = vdwg.mxu0
    %v219 = vmax.f32 %v214, 0.0
    %v220 = vld [vmem:[%s6] sm:$0x1]
    %v222 = vlaneseq
    %v223 = vshrl.u32 %v222, 7
    %v224 = vsub.s32 0, %v223
    %v225 = vrot.slane %v220, %v224
    %v227 = vmul.f32 %v219, %v225
    %vm228 = vcmask 1041408
    %v229 = vsel %vm228, %v227, 0.0
    %230 = vadd.xlane.f32.xlu0 %v229
    %v231 = vpop.xlane.xlu0 %230
    %s232 = sld [smem:[#allocation3]]
    %v233 = vstv %s232
    %v234 = vadd.f32 %v231, %v233
    %v236 = vlaneseq
    %v237 = vand.u32 %v236, 127
    %v238 = vlaneseq
    %v239 = vshrl.u32 %v238, 7
    %v240 = vsub.s32 %v237, %v239
    %v241 = vrot.slane %v234, %v240
    %vm243 = vcmask 8192
    %244 = vst.msk [vmem:[#allocation4] sm:$0x1] %vm243, %v241
    // Predicated region
    $region34: #{reward_model_forward.1} parent=1 // pred_check
      _
    $region35: #{reward_model_forward.1} parent=1 // pred_check_branch
      %246 = sbr.rel (0) target = $region37
    $region36: #{reward_model_forward.1} parent=1 // pred_region
      %s248 = ssub.s32 16, 16
      %249 = vsyncadd [#allocation5], %s248
      %s251 = sshll.u32 [#allocation4], 4
      %s252 = int_to_ptr.vmem [resolvable:$true] %s251
      %254 = dma.vmem_to_hbm [thread:$0]  %s252, 16, %s8, [#allocation5]
    $region37: #{reward_model_forward.1} parent=1 // pred_fallthru
      _
    // Predicated region
    $region38: #{reward_model_forward.1} parent=1 // pred_check
      _
    $region39: #{reward_model_forward.1} parent=1 // pred_check_branch
      %256 = sbr.rel (0) target = $region41
    $region40: #{reward_model_forward.1} parent=1 // pred_region
      %257 = dma.done [#allocation5], 16
    $region41: #{reward_model_forward.1} parent=1 // pred_fallthru
      _
    %258 = vsyncpa [#allocation5], 1

</llo_original>
